<compile_context>
chip_gen: v7x
topology: tpu7x:2x2x1
jax: 0.10.0
libtpu: 0.0.40
codegen_flags: <defaults>
</compile_context>

<pallas_src>
import jax
import jax.numpy as jnp
from jax.experimental import pallas as pl
from jax.experimental.pallas import tpu as pltpu


_LANES = 512            # lane-dense last dim (multiple of 128)
_MAX_ROWS_PER_TILE = 512  # keeps double-buffered working set ~4 MiB


def _round_up(a: int, b: int) -> int:
    return ((a + b - 1) // b) * b


def _identity_cast_kernel(x_ref, o_ref):
    # x.to(torch.float32) with x already float32 -> identity; astype is a
    # no-op cast and keeps the kernel correct if the input dtype ever differs.
    o_ref[...] = x_ref[...].astype(o_ref.dtype)


def elementwise_to_dtype_identity(x: jax.Array) -> jax.Array:
    """torch-equivalent of x.to(torch.float32, False, False) for x: f32[R, C]."""
    assert x.ndim == 2, "module annotates a rank-2 input"
    orig_shape = x.shape
    n = x.size

    # --- Re-layout to a lane-dense 2-D slab (rows, _LANES). -----------------
    flat = x.reshape(-1)
    n_pad = _round_up(n, _LANES)
    if n_pad != n:
        flat = jnp.pad(flat, (0, n_pad - n))
    rows = n_pad // _LANES

    # Row-tile size: multiple of 8 (sublane rule), capped for VMEM budget.
    if rows <= _MAX_ROWS_PER_TILE:
        tr = _round_up(rows, 8)
    else:
        tr = _MAX_ROWS_PER_TILE
    rows_pad = _round_up(rows, tr)
    if rows_pad != rows:
        flat = jnp.pad(flat, (0, (rows_pad - rows) * _LANES))
    x2 = flat.reshape(rows_pad, _LANES)

    grid = (rows_pad // tr,)

    out = pl.pallas_call(
        _identity_cast_kernel,
        out_shape=jax.ShapeDtypeStruct((rows_pad, _LANES), jnp.float32),
        grid=grid,
        in_specs=[pl.BlockSpec((tr, _LANES), lambda i: (i, 0))],
        out_specs=pl.BlockSpec((tr, _LANES), lambda i: (i, 0)),
        compiler_params=pltpu.CompilerParams(
            dimension_semantics=("parallel",),
        ),
    )(x2)

    # Undo the layout plumbing.
    return out.reshape(-1)[:n].reshape(orig_shape)


if __name__ == "__main__":
    key = jax.random.PRNGKey(0)
    # Small shape consistent with the ([-1, -1], float32) annotation.
    x = jax.random.normal(key, (8, 32), dtype=jnp.float32)

    out = elementwise_to_dtype_identity(x)
    out = jax.block_until_ready(out)

    # Reference: identity dtype cast.
    ref = x.astype(jnp.float32)
    assert out.dtype == jnp.float32
    assert out.shape == x.shape
    assert bool(jnp.all(out == ref))

    print("KERNEL_OK")
</pallas_src>

<mosaic_0001>
module attributes {stable_mosaic.version = 11 : i64} {
  func.func @_identity_cast_kernel(%arg0: i32, %arg1: memref<8x512xf32, #tpu.memory_space<vmem>>, %arg2: memref<8x512xf32, #tpu.memory_space<vmem>>) attributes {dimension_semantics = [#tpu.dimension_semantics<parallel>], iteration_bounds = array<i64: 1>, scalar_prefetch = 0 : i64, scratch_operands = 0 : i64, tpu.core_type = #tpu.core_type<tc>, window_params = [{transform_indices = @transform_0, window_bounds = array<i64: 8, 512>}, {transform_indices = @transform_1, window_bounds = array<i64: 8, 512>}]} {
    %c0 = arith.constant 0 : index
    %c0_0 = arith.constant 0 : index
    %0 = vector.load %arg1[%c0, %c0_0] : memref<8x512xf32, #tpu.memory_space<vmem>>, vector<8x512xf32>
    %c0_1 = arith.constant 0 : index
    %c0_2 = arith.constant 0 : index
    %1 = vector.load %arg2[%c0_1, %c0_2] : memref<8x512xf32, #tpu.memory_space<vmem>>, vector<8x512xf32>
    tpu.vector_store %arg2[%c0_1, %c0_2], %0 {strides = array<i32>} : memref<8x512xf32, #tpu.memory_space<vmem>>, vector<8x512xf32>,
    return
  }
  func.func @transform_0(%arg0: i32) -> (i32, i32) {
    %c0_i32 = arith.constant 0 : i32
    %c0_i32_0 = arith.constant 0 : i32
    return %arg0, %c0_i32 : i32, i32
  }
  func.func @transform_1(%arg0: i32) -> (i32, i32) {
    %c0_i32 = arith.constant 0 : i32
    %c0_i32_0 = arith.constant 0 : i32
    return %arg0, %c0_i32 : i32, i32
  }
}

</mosaic_0001>

<llo_original>
// kernel: tpu_custom_call.1
$region0: #{tpu_custom_call.1}
  #allocation0 [shape = 'u32[]', space=smem, size = 0x4, offset = 0x4, fixed_abs, tag = 'smem constant byte address 0x4 - core index']
  #allocation1 [shape = 'u32[144,128]{1,0:T(1,128)}', space=vmem, size = 0x12000, scoped, tag = 'internal scratch']
  %s0 = inlined_call_operand.hbm [shape: f32[8,512], index: 0, kind: input, shape index: {}]
  %s1 = inlined_call_operand.hbm [shape: f32[8,512], index: 1, kind: output, shape index: {}]
  %s2 = sld [smem:[#allocation0]]
  $region18: #{tpu_custom_call.1} parent=0
    _
  %s4 = ssub.s32 1, %s2
  %s5 = scalar_select 0, %s4, %s2
  $region1: #{tpu_custom_call.1} parent=0
    #allocation2 [shape = 'u8[16384]{0}', space=vmem, size = 0x4000, scoped, tag = 'input window, operand 0, single buffered']
    #allocation3 [shape = 's32[1]{0}', space=sflag, size = 0x4, scoped, tag = 'scoped memory for tpu_custom_call.1']
    #allocation4 [shape = 's32[1]{0}', space=sflag, size = 0x4, scoped, tag = 'scoped memory for tpu_custom_call.1']
    #allocation5 [shape = 'u8[16384]{0}', space=vmem, size = 0x4000, scoped, tag = 'output window, operand 0, single buffered']
    %6 = vsyncpa [#allocation3], 0
    %7 = vsyncpa [#allocation4], 0
    // Predicated region
    $region2: #{tpu_custom_call.1} parent=1 // pred_check
      _
    $region3: #{tpu_custom_call.1} parent=1 // pred_check_branch
      %9 = sbr.rel (0) target = $region5
    $region4: #{tpu_custom_call.1} parent=1 // pred_region
      %s11 = ssub.s32 512, 512
      %12 = vsyncadd [#allocation3], %s11
      %s14 = sshll.u32 [#allocation2], 4
      %s15 = int_to_ptr.vmem [resolvable:$true] %s14
      %17 = dma.hbm_to_vmem [thread:$0]  %s0, 512, %s15, [#allocation3]
    $region5: #{tpu_custom_call.1} parent=1 // pred_fallthru
      _
    // Predicated region
    $region6: #{tpu_custom_call.1} parent=1 // pred_check
      _
    $region7: #{tpu_custom_call.1} parent=1 // pred_check_branch
      %19 = sbr.rel (0) target = $region9
    $region8: #{tpu_custom_call.1} parent=1 // pred_region
      %20 = dma.done [#allocation3], 512
    $region9: #{tpu_custom_call.1} parent=1 // pred_fallthru
      _
    %v21 = vld [vmem:[#allocation2] sm:$0xff]
    %v22 = vld [vmem:[#allocation2 + $0x8] sm:$0xff]
    %v23 = vld [vmem:[#allocation2 + $0x10] sm:$0xff]
    %v24 = vld [vmem:[#allocation2 + $0x18] sm:$0xff]
    %25 = vst [vmem:[#allocation5] sm:$0xff] %v21
    %26 = vst [vmem:[#allocation5 + $0x8] sm:$0xff] %v22
    %27 = vst [vmem:[#allocation5 + $0x10] sm:$0xff] %v23
    %28 = vst [vmem:[#allocation5 + $0x18] sm:$0xff] %v24
    // Predicated region
    $region10: #{tpu_custom_call.1} parent=1 // pred_check
      _
    $region11: #{tpu_custom_call.1} parent=1 // pred_check_branch
      %30 = sbr.rel (0) target = $region13
    $region12: #{tpu_custom_call.1} parent=1 // pred_region
      %s32 = ssub.s32 512, 512
      %33 = vsyncadd [#allocation4], %s32
      %s35 = sshll.u32 [#allocation5], 4
      %s36 = int_to_ptr.vmem [resolvable:$true] %s35
      %38 = dma.vmem_to_hbm [thread:$0]  %s36, 512, %s1, [#allocation4]
    $region13: #{tpu_custom_call.1} parent=1 // pred_fallthru
      _
    // Predicated region
    $region14: #{tpu_custom_call.1} parent=1 // pred_check
      _
    $region15: #{tpu_custom_call.1} parent=1 // pred_check_branch
      %40 = sbr.rel (0) target = $region17
    $region16: #{tpu_custom_call.1} parent=1 // pred_region
      %41 = dma.done [#allocation4], 512
    $region17: #{tpu_custom_call.1} parent=1 // pred_fallthru
      _
    %42 = vsyncpa [#allocation3], 1
    %43 = vsyncpa [#allocation4], 1

</llo_original>
